<compile_context>
chip_gen: v7x
topology: tpu7x:2x2x1
jax: 0.10.0
libtpu: 0.0.40
codegen_flags: <defaults>
</compile_context>

<pallas_src>
import functools
import math

import jax
import jax.numpy as jnp
from jax.experimental import pallas as pl
from jax.experimental.pallas import tpu as pltpu

N_ROWS = 256 ** 2          # fixed by the module's x.view(256**2, -1)
_LANES = 128
_ROW_SPLIT = 2             # row-split "parallel" axis (feeds both v7x TCs)


def _pow2_floor(n):
    return 1 << (max(int(n), 1).bit_length() - 1)


def _tpu_vmem_capacity_bytes():
    try:
        info = pltpu.get_tpu_info()
        for attr in ("vmem_capacity_bytes", "vmem_capacity", "vmem_bytes"):
            cap = getattr(info, attr, None)
            if cap:
                return int(cap)
    except Exception:
        pass
    return 64 * 1024 * 1024      # conservative (v7x-sized) fallback


_VMEM_CAP = _tpu_vmem_capacity_bytes()
if _VMEM_CAP > 96 * 1024 * 1024:              # v5e / v6e: 128 MiB VMEM
    _BLOCK_BYTES_BUDGET = 6 * 1024 * 1024     # per (input, pipeline-buffer) block
    _VMEM_LIMIT_BYTES = 80 * 1024 * 1024
else:                                          # v7x-class: 64 MiB per TC
    _BLOCK_BYTES_BUDGET = 3 * 1024 * 1024
    _VMEM_LIMIT_BYTES = 40 * 1024 * 1024


def _stats_kernel(tile_rows, x_ref, y_ref, out_ref):
    """Single-pass per-(kernel-)column statistics with an exact Chan merge.

    Grid = (row_half, row_tile).  out_ref (8, C) is resident across the row
    tile axis (its index_map ignores t) and holds the running stats of the
    current half: row 0 mean_x, 1 mean_y, 2 M2x, 3 M2y, 4 Cxy.
    """
    t = pl.program_id(1)

    @pl.when(t == 0)
    def _():
        out_ref[...] = jnp.zeros_like(out_ref)

    x = x_ref[...].astype(jnp.float32)
    y = y_ref[...].astype(jnp.float32)

    # One pass over the tile: shift by the tile's first row (close to the
    # column mean for well-scaled data, so no catastrophic cancellation) and
    # reduce to five (1, C) raw sums.
    x0 = x[0:1, :]
    y0 = y[0:1, :]
    xs = x - x0
    ys = y - y0
    sx = jnp.sum(xs, axis=0, keepdims=True)
    sy = jnp.sum(ys, axis=0, keepdims=True)
    sxx = jnp.sum(xs * xs, axis=0, keepdims=True)
    syy = jnp.sum(ys * ys, axis=0, keepdims=True)
    sxy = jnp.sum(xs * ys, axis=0, keepdims=True)

    n_b = jnp.float32(tile_rows)
    inv_nb = jnp.float32(1.0 / tile_rows)
    mxs = sx * inv_nb                      # shifted tile means
    mys = sy * inv_nb
    mx_b = x0 + mxs                        # absolute tile means
    my_b = y0 + mys
    m2x_b = jnp.maximum(sxx - n_b * mxs * mxs, 0.0)
    m2y_b = jnp.maximum(syy - n_b * mys * mys, 0.0)
    cxy_b = sxy - n_b * mxs * mys

    # Chan merge: running stats (count n_a = t*tile_rows) + this tile (n_b).
    n_a = n_b * t.astype(jnp.float32)
    w_b = n_b / (n_a + n_b)                # == 1 when t == 0
    f = n_a * w_b                          # == n_a*n_b/(n_a+n_b), 0 when t == 0

    mx_a = out_ref[0:1, :]
    my_a = out_ref[1:2, :]
    dx = mx_b - mx_a
    dy = my_b - my_a
    out_ref[0:1, :] = mx_a + dx * w_b
    out_ref[1:2, :] = my_a + dy * w_b
    out_ref[2:3, :] = out_ref[2:3, :] + m2x_b + (dx * dx) * f
    out_ref[3:4, :] = out_ref[3:4, :] + m2y_b + (dy * dy) * f
    out_ref[4:5, :] = out_ref[4:5, :] + cxy_b + (dx * dy) * f


def npcc_loss(x, y):
    """Pallas implementation of NPCCloss.forward(x, y)."""
    if x.size != y.size:
        raise ValueError("x and y must have the same number of elements")
    if x.size % N_ROWS != 0:
        raise ValueError("element count must be a multiple of 256**2")
    c = x.size // N_ROWS

    def _prep(a):
        if a.dtype not in (jnp.float32, jnp.bfloat16, jnp.float16):
            a = a.astype(jnp.float32)
        return a

    x = _prep(x)
    y = _prep(y)

    lane_dense = c < _LANES
    if lane_dense:
        # Lane-dense slab: flat index f = row*C + col, and kc % C == 0
        # => column == lane % C.  Free row-major reshape, all lanes useful.
        kc = (c * _LANES) // math.gcd(c, _LANES)     # lcm(C, 128)
        s_rows = (N_ROWS * c) // kc                  # = 512 * gcd(C, 128)
    else:
        kc = c
        s_rows = N_ROWS
    xv = jnp.reshape(x, (s_rows, kc))
    yv = jnp.reshape(y, (s_rows, kc))

    # Generation/dtype-aware tile height.  Cap at s_rows // 4 so each row
    # half gets >= 2 tiles (DMA/compute overlap); everything is a power of
    # two, so tiles evenly divide each half (required by the Chan merge).
    itemsize = max(xv.dtype.itemsize, yv.dtype.itemsize)
    lane_pad = ((kc + _LANES - 1) // _LANES) * _LANES
    row_cap = max(1, _BLOCK_BYTES_BUDGET // (lane_pad * itemsize))
    min_rows = 8 if itemsize >= 4 else 16
    tile_rows = max(min_rows,
                    min(_pow2_floor(row_cap), s_rows // (2 * _ROW_SPLIT)))
    half_rows = s_rows // _ROW_SPLIT
    assert s_rows % _ROW_SPLIT == 0, (s_rows,)
    assert half_rows % tile_rows == 0, (s_rows, tile_rows)
    nt_half = half_rows // tile_rows

    kernel = functools.partial(_stats_kernel, tile_rows)
    stats = pl.pallas_call(
        kernel,
        out_shape=jax.ShapeDtypeStruct((_ROW_SPLIT, 8, kc), jnp.float32),
        grid_spec=pltpu.PrefetchScalarGridSpec(
            num_scalar_prefetch=0,
            grid=(_ROW_SPLIT, nt_half),              # (row half, row tile)
            in_specs=[
                pl.BlockSpec((tile_rows, kc),
                             lambda r, t: (r * nt_half + t, 0)),
                pl.BlockSpec((tile_rows, kc),
                             lambda r, t: (r * nt_half + t, 0)),
            ],
            out_specs=pl.BlockSpec((None, 8, kc), lambda r, t: (r, 0, 0)),
        ),
        compiler_params=pltpu.CompilerParams(
            dimension_semantics=("parallel", "arbitrary"),
            vmem_limit_bytes=_VMEM_LIMIT_BYTES,
        ),
    )(xv, yv)

    # Epilogue: exact between/within-group fold of the (row half x lane group)
    # statistics into per-real-column statistics.  Every group holds exactly
    # half_rows elements of a single original column.
    mx, my = stats[:, 0, :], stats[:, 1, :]
    m2x, m2y, cxy = stats[:, 2, :], stats[:, 3, :], stats[:, 4, :]

    n_groups = _ROW_SPLIT * (kc // c)
    mx, my, m2x, m2y, cxy = (a.reshape(n_groups, c)
                             for a in (mx, my, m2x, m2y, cxy))
    n_group = jnp.float32(half_rows)

    mxc = jnp.mean(mx, axis=0)
    myc = jnp.mean(my, axis=0)
    dmx = mx - mxc
    dmy = my - myc
    m2x = jnp.sum(m2x, axis=0) + n_group * jnp.sum(dmx * dmx, axis=0)
    m2y = jnp.sum(m2y, axis=0) + n_group * jnp.sum(dmy * dmy, axis=0)
    cxy = jnp.sum(cxy, axis=0) + n_group * jnp.sum(dmx * dmy, axis=0)

    n = jnp.float32(N_ROWS)
    eps = jnp.float32(1e-8)
    m2x = jnp.maximum(m2x, 0.0)
    m2y = jnp.maximum(m2y, 0.0)
    corr = (cxy / n) / (jnp.sqrt(m2x / n + eps) * jnp.sqrt(m2y / n + eps))
    return jnp.mean(-corr)


def _npcc_ref(x, y):
    """Pure-JAX reference mirroring the PyTorch forward exactly."""
    xf = jnp.reshape(x, (N_ROWS, -1)).astype(jnp.float32)
    yf = jnp.reshape(y, (N_ROWS, -1)).astype(jnp.float32)
    vx = xf - jnp.mean(xf, axis=0, keepdims=True)
    vy = yf - jnp.mean(yf, axis=0, keepdims=True)
    c = jnp.mean(vx * vy, axis=0) / (
        jnp.sqrt(jnp.mean(vx ** 2, axis=0) + 1e-8)
        * jnp.sqrt(jnp.mean(vy ** 2, axis=0) + 1e-8)
    )
    return jnp.mean(-c)


if __name__ == "__main__":
    loss_fn = jax.jit(npcc_loss)
    ref_fn = jax.jit(_npcc_ref)
    key = jax.random.PRNGKey(0)
    tol = 5e-5

    def check(name, xx, yy):
        out = jax.block_until_ready(loss_fn(xx, yy))
        ref = jax.block_until_ready(ref_fn(xx, yy))
        assert abs(float(out) - float(ref)) < tol, (name, float(out), float(ref))

    # Case 1: canonical tiny shape (C = 2, lane-dense, L = 128).
    kx, ky, key = jax.random.split(key, 3)
    x1 = jax.random.normal(kx, (2, 1, 256, 256), dtype=jnp.float32)
    y1 = 0.5 * x1 + 0.5 * jax.random.normal(ky, (2, 1, 256, 256), dtype=jnp.float32)
    check("c2", x1, y1)

    # Case 2: C = 16 (lane-dense, multiple row tiles per half -> Chan merge).
    kx, ky, key = jax.random.split(key, 3)
    x2 = jax.random.normal(kx, (2, 8, 256, 256), dtype=jnp.float32)
    y2 = 0.5 * x2 + 0.5 * jax.random.normal(ky, (2, 8, 256, 256), dtype=jnp.float32)
    check("c16", x2, y2)

    # Case 3: C = 3 (generalized lane-dense slab, L = lcm(3, 128) = 384).
    kx, ky, key = jax.random.split(key, 3)
    x3 = jax.random.normal(kx, (3, 1, 256, 256), dtype=jnp.float32)
    y3 = 0.5 * x3 + 0.5 * jax.random.normal(ky, (3, 1, 256, 256), dtype=jnp.float32)
    check("c3", x3, y3)

    # Case 4: C = 256 in bfloat16 (plain wide layout, bf16 tile sizing).
    kx, ky, key = jax.random.split(key, 3)
    x4 = jax.random.normal(kx, (2, 128, 256, 256), dtype=jnp.float32).astype(jnp.bfloat16)
    n4 = jax.random.normal(ky, (2, 128, 256, 256), dtype=jnp.float32).astype(jnp.bfloat16)
    y4 = (0.5 * x4.astype(jnp.float32) + 0.5 * n4.astype(jnp.float32)).astype(jnp.bfloat16)
    check("c256_bf16", x4, y4)

    print("KERNEL_OK")
</pallas_src>

<mosaic_0001>
module attributes {stable_mosaic.version = 11 : i64} {
  func.func @_stats_kernel(%arg0: i32, %arg1: i32, %arg2: memref<256x128xf32, #tpu.memory_space<vmem>>, %arg3: memref<256x128xf32, #tpu.memory_space<vmem>>, %arg4: memref<1x8x128xf32, #tpu.memory_space<vmem>>) attributes {dimension_semantics = [#tpu.dimension_semantics<parallel>, #tpu.dimension_semantics<arbitrary>], iteration_bounds = array<i64: 2, 2>, scalar_prefetch = 0 : i64, scratch_operands = 0 : i64, tpu.core_type = #tpu.core_type<tc>, window_params = [{transform_indices = @transform_0, window_bounds = array<i64: 256, 128>}, {transform_indices = @transform_1, window_bounds = array<i64: 256, 128>}, {transform_indices = @transform_2, window_bounds = array<i64: 1, 8, 128>}]} {
    %c0_i32 = arith.constant 0 : i32
    %0 = arith.cmpi eq, %arg1, %c0_i32 : i32
    %1 = arith.extui %0 : i1 to i32
    %c0_i32_0 = arith.constant 0 : i32
    %2 = arith.cmpi ne, %1, %c0_i32_0 : i32
    scf.if %2 {
      %cst_44 = arith.constant 0.000000e+00 : f32
      %99 = vector.broadcast %cst_44 : f32 to vector<8x128xf32>
      %c0_45 = arith.constant 0 : index
      %c0_46 = arith.constant 0 : index
      %c0_47 = arith.constant 0 : index
      %100 = vector.load %arg4[%c0_45, %c0_46, %c0_47] : memref<1x8x128xf32, #tpu.memory_space<vmem>>, vector<1x8x128xf32>
      %101 = vector.shape_cast %100 : vector<1x8x128xf32> to vector<8x128xf32>
      %102 = vector.shape_cast %99 : vector<8x128xf32> to vector<1x8x128xf32>
      tpu.vector_store %arg4[%c0_45, %c0_46, %c0_47], %102 {strides = array<i32>} : memref<1x8x128xf32, #tpu.memory_space<vmem>>, vector<1x8x128xf32>,
    } else {
    }
    %c0 = arith.constant 0 : index
    %c0_1 = arith.constant 0 : index
    %3 = vector.load %arg2[%c0, %c0_1] : memref<256x128xf32, #tpu.memory_space<vmem>>, vector<256x128xf32>
    %c0_2 = arith.constant 0 : index
    %c0_3 = arith.constant 0 : index
    %4 = vector.load %arg3[%c0_2, %c0_3] : memref<256x128xf32, #tpu.memory_space<vmem>>, vector<256x128xf32>
    %5 = vector.extract_strided_slice %3 {offsets = [0, 0], sizes = [1, 128], strides = [1, 1]} : vector<256x128xf32> to vector<1x128xf32>
    %6 = vector.extract_strided_slice %4 {offsets = [0, 0], sizes = [1, 128], strides = [1, 1]} : vector<256x128xf32> to vector<1x128xf32>
    %7 = vector.broadcast %5 : vector<1x128xf32> to vector<256x128xf32>
    %8 = arith.subf %3, %7 : vector<256x128xf32>
    %9 = vector.broadcast %6 : vector<1x128xf32> to vector<256x128xf32>
    %10 = arith.subf %4, %9 : vector<256x128xf32>
    %cst = arith.constant dense<0.000000e+00> : vector<128xf32>
    %11 = vector.multi_reduction <add>, %8, %cst [0] : vector<256x128xf32> to vector<128xf32>
    %12 = vector.shape_cast %11 : vector<128xf32> to vector<1x128xf32>
    %cst_4 = arith.constant dense<0.000000e+00> : vector<128xf32>
    %13 = vector.multi_reduction <add>, %10, %cst_4 [0] : vector<256x128xf32> to vector<128xf32>
    %14 = vector.shape_cast %13 : vector<128xf32> to vector<1x128xf32>
    %15 = arith.mulf %8, %8 : vector<256x128xf32>
    %cst_5 = arith.constant dense<0.000000e+00> : vector<128xf32>
    %16 = vector.multi_reduction <add>, %15, %cst_5 [0] : vector<256x128xf32> to vector<128xf32>
    %17 = vector.shape_cast %16 : vector<128xf32> to vector<1x128xf32>
    %18 = arith.mulf %10, %10 : vector<256x128xf32>
    %cst_6 = arith.constant dense<0.000000e+00> : vector<128xf32>
    %19 = vector.multi_reduction <add>, %18, %cst_6 [0] : vector<256x128xf32> to vector<128xf32>
    %20 = vector.shape_cast %19 : vector<128xf32> to vector<1x128xf32>
    %21 = arith.mulf %8, %10 : vector<256x128xf32>
    %cst_7 = arith.constant dense<0.000000e+00> : vector<128xf32>
    %22 = vector.multi_reduction <add>, %21, %cst_7 [0] : vector<256x128xf32> to vector<128xf32>
    %23 = vector.shape_cast %22 : vector<128xf32> to vector<1x128xf32>
    %cst_8 = arith.constant 3.906250e-03 : f32
    %24 = vector.broadcast %cst_8 : f32 to vector<1x128xf32>
    %25 = arith.mulf %12, %24 : vector<1x128xf32>
    %cst_9 = arith.constant 3.906250e-03 : f32
    %26 = vector.broadcast %cst_9 : f32 to vector<1x128xf32>
    %27 = arith.mulf %14, %26 : vector<1x128xf32>
    %28 = arith.addf %5, %25 : vector<1x128xf32>
    %29 = arith.addf %6, %27 : vector<1x128xf32>
    %cst_10 = arith.constant 2.560000e+02 : f32
    %30 = vector.broadcast %cst_10 : f32 to vector<1x128xf32>
    %31 = arith.mulf %30, %25 : vector<1x128xf32>
    %32 = arith.mulf %31, %25 : vector<1x128xf32>
    %33 = arith.subf %17, %32 : vector<1x128xf32>
    %cst_11 = arith.constant 0.000000e+00 : f32
    %34 = vector.broadcast %cst_11 : f32 to vector<1x128xf32>
    %35 = arith.maximumf %33, %34 : vector<1x128xf32>
    %cst_12 = arith.constant 2.560000e+02 : f32
    %36 = vector.broadcast %cst_12 : f32 to vector<1x128xf32>
    %37 = arith.mulf %36, %27 : vector<1x128xf32>
    %38 = arith.mulf %37, %27 : vector<1x128xf32>
    %39 = arith.subf %20, %38 : vector<1x128xf32>
    %cst_13 = arith.constant 0.000000e+00 : f32
    %40 = vector.broadcast %cst_13 : f32 to vector<1x128xf32>
    %41 = arith.maximumf %39, %40 : vector<1x128xf32>
    %cst_14 = arith.constant 2.560000e+02 : f32
    %42 = vector.broadcast %cst_14 : f32 to vector<1x128xf32>
    %43 = arith.mulf %42, %25 : vector<1x128xf32>
    %44 = arith.mulf %43, %27 : vector<1x128xf32>
    %45 = arith.subf %23, %44 : vector<1x128xf32>
    %46 = arith.sitofp %arg1 : i32 to f32
    %cst_15 = arith.constant 2.560000e+02 : f32
    %47 = arith.mulf %cst_15, %46 : f32
    %cst_16 = arith.constant 2.560000e+02 : f32
    %48 = arith.addf %47, %cst_16 : f32
    %cst_17 = arith.constant 2.560000e+02 : f32
    %49 = arith.divf %cst_17, %48 : f32
    %50 = arith.mulf %47, %49 : f32
    %c0_18 = arith.constant 0 : index
    %c0_19 = arith.constant 0 : index
    %c0_20 = arith.constant 0 : index
    %51 = vector.load %arg4[%c0_18, %c0_19, %c0_20] : memref<1x8x128xf32, #tpu.memory_space<vmem>>, vector<1x1x128xf32>
    %52 = vector.shape_cast %51 : vector<1x1x128xf32> to vector<1x128xf32>
    %c0_21 = arith.constant 0 : index
    %c1 = arith.constant 1 : index
    %c0_22 = arith.constant 0 : index
    %53 = vector.load %arg4[%c0_21, %c1, %c0_22] : memref<1x8x128xf32, #tpu.memory_space<vmem>>, vector<1x1x128xf32>
    %54 = vector.shape_cast %53 : vector<1x1x128xf32> to vector<1x128xf32>
    %55 = arith.subf %28, %52 : vector<1x128xf32>
    %56 = arith.subf %29, %54 : vector<1x128xf32>
    %57 = vector.broadcast %49 : f32 to vector<1x128xf32>
    %58 = arith.mulf %55, %57 : vector<1x128xf32>
    %59 = arith.addf %52, %58 : vector<1x128xf32>
    %c0_23 = arith.constant 0 : index
    %c0_24 = arith.constant 0 : index
    %c0_25 = arith.constant 0 : index
    %60 = vector.load %arg4[%c0_23, %c0_24, %c0_25] : memref<1x8x128xf32, #tpu.memory_space<vmem>>, vector<1x1x128xf32>
    %61 = vector.shape_cast %60 : vector<1x1x128xf32> to vector<1x128xf32>
    %62 = vector.shape_cast %59 : vector<1x128xf32> to vector<1x1x128xf32>
    tpu.vector_store %arg4[%c0_23, %c0_24, %c0_25], %62 {strides = array<i32>} : memref<1x8x128xf32, #tpu.memory_space<vmem>>, vector<1x1x128xf32>,
    %63 = vector.broadcast %49 : f32 to vector<1x128xf32>
    %64 = arith.mulf %56, %63 : vector<1x128xf32>
    %65 = arith.addf %54, %64 : vector<1x128xf32>
    %c0_26 = arith.constant 0 : index
    %c1_27 = arith.constant 1 : index
    %c0_28 = arith.constant 0 : index
    %66 = vector.load %arg4[%c0_26, %c1_27, %c0_28] : memref<1x8x128xf32, #tpu.memory_space<vmem>>, vector<1x1x128xf32>
    %67 = vector.shape_cast %66 : vector<1x1x128xf32> to vector<1x128xf32>
    %68 = vector.shape_cast %65 : vector<1x128xf32> to vector<1x1x128xf32>
    tpu.vector_store %arg4[%c0_26, %c1_27, %c0_28], %68 {strides = array<i32>} : memref<1x8x128xf32, #tpu.memory_space<vmem>>, vector<1x1x128xf32>,
    %c0_29 = arith.constant 0 : index
    %c2 = arith.constant 2 : index
    %c0_30 = arith.constant 0 : index
    %69 = vector.load %arg4[%c0_29, %c2, %c0_30] : memref<1x8x128xf32, #tpu.memory_space<vmem>>, vector<1x1x128xf32>
    %70 = vector.shape_cast %69 : vector<1x1x128xf32> to vector<1x128xf32>
    %71 = arith.addf %70, %35 : vector<1x128xf32>
    %72 = arith.mulf %55, %55 : vector<1x128xf32>
    %73 = vector.broadcast %50 : f32 to vector<1x128xf32>
    %74 = arith.mulf %72, %73 : vector<1x128xf32>
    %75 = arith.addf %71, %74 : vector<1x128xf32>
    %c0_31 = arith.constant 0 : index
    %c2_32 = arith.constant 2 : index
    %c0_33 = arith.constant 0 : index
    %76 = vector.load %arg4[%c0_31, %c2_32, %c0_33] : memref<1x8x128xf32, #tpu.memory_space<vmem>>, vector<1x1x128xf32>
    %77 = vector.shape_cast %76 : vector<1x1x128xf32> to vector<1x128xf32>
    %78 = vector.shape_cast %75 : vector<1x128xf32> to vector<1x1x128xf32>
    tpu.vector_store %arg4[%c0_31, %c2_32, %c0_33], %78 {strides = array<i32>} : memref<1x8x128xf32, #tpu.memory_space<vmem>>, vector<1x1x128xf32>,
    %c0_34 = arith.constant 0 : index
    %c3 = arith.constant 3 : index
    %c0_35 = arith.constant 0 : index
    %79 = vector.load %arg4[%c0_34, %c3, %c0_35] : memref<1x8x128xf32, #tpu.memory_space<vmem>>, vector<1x1x128xf32>
    %80 = vector.shape_cast %79 : vector<1x1x128xf32> to vector<1x128xf32>
    %81 = arith.addf %80, %41 : vector<1x128xf32>
    %82 = arith.mulf %56, %56 : vector<1x128xf32>
    %83 = vector.broadcast %50 : f32 to vector<1x128xf32>
    %84 = arith.mulf %82, %83 : vector<1x128xf32>
    %85 = arith.addf %81, %84 : vector<1x128xf32>
    %c0_36 = arith.constant 0 : index
    %c3_37 = arith.constant 3 : index
    %c0_38 = arith.constant 0 : index
    %86 = vector.load %arg4[%c0_36, %c3_37, %c0_38] : memref<1x8x128xf32, #tpu.memory_space<vmem>>, vector<1x1x128xf32>
    %87 = vector.shape_cast %86 : vector<1x1x128xf32> to vector<1x128xf32>
    %88 = vector.shape_cast %85 : vector<1x128xf32> to vector<1x1x128xf32>
    tpu.vector_store %arg4[%c0_36, %c3_37, %c0_38], %88 {strides = array<i32>} : memref<1x8x128xf32, #tpu.memory_space<vmem>>, vector<1x1x128xf32>,
    %c0_39 = arith.constant 0 : index
    %c4 = arith.constant 4 : index
    %c0_40 = arith.constant 0 : index
    %89 = vector.load %arg4[%c0_39, %c4, %c0_40] : memref<1x8x128xf32, #tpu.memory_space<vmem>>, vector<1x1x128xf32>
    %90 = vector.shape_cast %89 : vector<1x1x128xf32> to vector<1x128xf32>
    %91 = arith.addf %90, %45 : vector<1x128xf32>
    %92 = arith.mulf %55, %56 : vector<1x128xf32>
    %93 = vector.broadcast %50 : f32 to vector<1x128xf32>
    %94 = arith.mulf %92, %93 : vector<1x128xf32>
    %95 = arith.addf %91, %94 : vector<1x128xf32>
    %c0_41 = arith.constant 0 : index
    %c4_42 = arith.constant 4 : index
    %c0_43 = arith.constant 0 : index
    %96 = vector.load %arg4[%c0_41, %c4_42, %c0_43] : memref<1x8x128xf32, #tpu.memory_space<vmem>>, vector<1x1x128xf32>
    %97 = vector.shape_cast %96 : vector<1x1x128xf32> to vector<1x128xf32>
    %98 = vector.shape_cast %95 : vector<1x128xf32> to vector<1x1x128xf32>
    tpu.vector_store %arg4[%c0_41, %c4_42, %c0_43], %98 {strides = array<i32>} : memref<1x8x128xf32, #tpu.memory_space<vmem>>, vector<1x1x128xf32>,
    return
  }
  func.func @transform_0(%arg0: i32, %arg1: i32) -> (i32, i32) {
    %c2_i32 = arith.constant 2 : i32
    %0 = arith.muli %arg0, %c2_i32 : i32
    %1 = arith.addi %0, %arg1 : i32
    %c0_i32 = arith.constant 0 : i32
    %c0_i32_0 = arith.constant 0 : i32
    return %1, %c0_i32 : i32, i32
  }
  func.func @transform_1(%arg0: i32, %arg1: i32) -> (i32, i32) {
    %c2_i32 = arith.constant 2 : i32
    %0 = arith.muli %arg0, %c2_i32 : i32
    %1 = arith.addi %0, %arg1 : i32
    %c0_i32 = arith.constant 0 : i32
    %c0_i32_0 = arith.constant 0 : i32
    return %1, %c0_i32 : i32, i32
  }
  func.func @transform_2(%arg0: i32, %arg1: i32) -> (i32, i32, i32) {
    %c0_i32 = arith.constant 0 : i32
    %c0_i32_0 = arith.constant 0 : i32
    %c0_i32_1 = arith.constant 0 : i32
    return %arg0, %c0_i32, %c0_i32_0 : i32, i32, i32
  }
}

</mosaic_0001>

<llo_original>
// kernel: squeeze.9
$region0: #{squeeze.9}
  %s0 = inlined_call_operand.vmem [shape: f32[2,128], index: 0, kind: input, shape index: {}]
  %s1 = inlined_call_operand.vmem [shape: f32[128,2], index: 1, kind: output, shape index: {}]
  $region1: #{squeeze.9} parent=0
    #allocation0 [shape = 'u8[4096]{0}', space=vmem, size = 0x1000, scoped, tag = 'scoped mem for input reshape']
    %s3 = sshllo.u32 0, 2
    %v4 = vld [vmem:[%s0] sm:%s3]
    %5 = vst [vmem:[#allocation0] sm:%s3] %v4
    %v6 = vld [vmem:[#allocation0] sm:$0x3]
    %vm7 = vcmask 15360
    %8 = vst.msk [vmem:[%s1] sm:$0x1] %vm7, %v6
    %s9 = scalar_lea.vmem %s1, 63
    %10 = vst.msk [vmem:[%s9] sm:$0x2] %vm7, %v6
    %v11 = vld [vmem:[#allocation0] sm:$0x3]
    %12 = vrot.lane.b32.xlu0 %v11, 126
    %v13 = vpop.permute.xlu0 %12
    %vm14 = vcmask 15360
    %s15 = scalar_lea.vmem %s1, 1
    %16 = vst.msk [vmem:[%s15] sm:$0x1] %vm14, %v13
    %s17 = scalar_lea.vmem %s1, 64
    %18 = vst.msk [vmem:[%s17] sm:$0x2] %vm14, %v13
    %v19 = vld [vmem:[#allocation0] sm:$0x3]
    %20 = vrot.lane.b32.xlu0 %v19, 124
    %v21 = vpop.permute.xlu0 %20
    %vm22 = vcmask 15360
    %s23 = scalar_lea.vmem %s1, 2
    %24 = vst.msk [vmem:[%s23] sm:$0x1] %vm22, %v21
    %s25 = scalar_lea.vmem %s1, 65
    %26 = vst.msk [vmem:[%s25] sm:$0x2] %vm22, %v21
    %v27 = vld [vmem:[#allocation0] sm:$0x3]
    %28 = vrot.lane.b32.xlu0 %v27, 122
    %v29 = vpop.permute.xlu0 %28
    %vm30 = vcmask 15360
    %s31 = scalar_lea.vmem %s1, 3
    %32 = vst.msk [vmem:[%s31] sm:$0x1] %vm30, %v29
    %s33 = scalar_lea.vmem %s1, 66
    %34 = vst.msk [vmem:[%s33] sm:$0x2] %vm30, %v29
    %v35 = vld [vmem:[#allocation0] sm:$0x3]
    %36 = vrot.lane.b32.xlu0 %v35, 120
    %v37 = vpop.permute.xlu0 %36
    %vm38 = vcmask 15360
    %s39 = scalar_lea.vmem %s1, 4
    %40 = vst.msk [vmem:[%s39] sm:$0x1] %vm38, %v37
    %s41 = scalar_lea.vmem %s1, 67
    %42 = vst.msk [vmem:[%s41] sm:$0x2] %vm38, %v37
    %v43 = vld [vmem:[#allocation0] sm:$0x3]
    %44 = vrot.lane.b32.xlu0 %v43, 118
    %v45 = vpop.permute.xlu0 %44
    %vm46 = vcmask 15360
    %s47 = scalar_lea.vmem %s1, 5
    %48 = vst.msk [vmem:[%s47] sm:$0x1] %vm46, %v45
    %s49 = scalar_lea.vmem %s1, 68
    %50 = vst.msk [vmem:[%s49] sm:$0x2] %vm46, %v45
    %v51 = vld [vmem:[#allocation0] sm:$0x3]
    %52 = vrot.lane.b32.xlu0 %v51, 116
    %v53 = vpop.permute.xlu0 %52
    %vm54 = vcmask 15360
    %s55 = scalar_lea.vmem %s1, 6
    %56 = vst.msk [vmem:[%s55] sm:$0x1] %vm54, %v53
    %s57 = scalar_lea.vmem %s1, 69
    %58 = vst.msk [vmem:[%s57] sm:$0x2] %vm54, %v53
    %v59 = vld [vmem:[#allocation0] sm:$0x3]
    %60 = vrot.lane.b32.xlu0 %v59, 114
    %v61 = vpop.permute.xlu0 %60
    %vm62 = vcmask 15360
    %s63 = scalar_lea.vmem %s1, 7
    %64 = vst.msk [vmem:[%s63] sm:$0x1] %vm62, %v61
    %s65 = scalar_lea.vmem %s1, 70
    %66 = vst.msk [vmem:[%s65] sm:$0x2] %vm62, %v61
    %v67 = vld [vmem:[#allocation0] sm:$0x3]
    %68 = vrot.lane.b32.xlu0 %v67, 112
    %v69 = vpop.permute.xlu0 %68
    %vm70 = vcmask 15360
    %s71 = scalar_lea.vmem %s1, 8
    %72 = vst.msk [vmem:[%s71] sm:$0x1] %vm70, %v69
    %s73 = scalar_lea.vmem %s1, 71
    %74 = vst.msk [vmem:[%s73] sm:$0x2] %vm70, %v69
    %v75 = vld [vmem:[#allocation0] sm:$0x3]
    %76 = vrot.lane.b32.xlu0 %v75, 110
    %v77 = vpop.permute.xlu0 %76
    %vm78 = vcmask 15360
    %s79 = scalar_lea.vmem %s1, 9
    %80 = vst.msk [vmem:[%s79] sm:$0x1] %vm78, %v77
    %s81 = scalar_lea.vmem %s1, 72
    %82 = vst.msk [vmem:[%s81] sm:$0x2] %vm78, %v77
    %v83 = vld [vmem:[#allocation0] sm:$0x3]
    %84 = vrot.lane.b32.xlu0 %v83, 108
    %v85 = vpop.permute.xlu0 %84
    %vm86 = vcmask 15360
    %s87 = scalar_lea.vmem %s1, 10
    %88 = vst.msk [vmem:[%s87] sm:$0x1] %vm86, %v85
    %s89 = scalar_lea.vmem %s1, 73
    %90 = vst.msk [vmem:[%s89] sm:$0x2] %vm86, %v85
    %v91 = vld [vmem:[#allocation0] sm:$0x3]
    %92 = vrot.lane.b32.xlu0 %v91, 106
    %v93 = vpop.permute.xlu0 %92
    %vm94 = vcmask 15360
    %s95 = scalar_lea.vmem %s1, 11
    %96 = vst.msk [vmem:[%s95] sm:$0x1] %vm94, %v93
    %s97 = scalar_lea.vmem %s1, 74
    %98 = vst.msk [vmem:[%s97] sm:$0x2] %vm94, %v93
    %v99 = vld [vmem:[#allocation0] sm:$0x3]
    %100 = vrot.lane.b32.xlu0 %v99, 104
    %v101 = vpop.permute.xlu0 %100
    %vm102 = vcmask 15360
    %s103 = scalar_lea.vmem %s1, 12
    %104 = vst.msk [vmem:[%s103] sm:$0x1] %vm102, %v101
    %s105 = scalar_lea.vmem %s1, 75
    %106 = vst.msk [vmem:[%s105] sm:$0x2] %vm102, %v101
    %v107 = vld [vmem:[#allocation0] sm:$0x3]
    %108 = vrot.lane.b32.xlu0 %v107, 102
    %v109 = vpop.permute.xlu0 %108
    %vm110 = vcmask 15360
    %s111 = scalar_lea.vmem %s1, 13
    %112 = vst.msk [vmem:[%s111] sm:$0x1] %vm110, %v109
    %s113 = scalar_lea.vmem %s1, 76
    %114 = vst.msk [vmem:[%s113] sm:$0x2] %vm110, %v109
    %v115 = vld [vmem:[#allocation0] sm:$0x3]
    %116 = vrot.lane.b32.xlu0 %v115, 100
    %v117 = vpop.permute.xlu0 %116
    %vm118 = vcmask 15360
    %s119 = scalar_lea.vmem %s1, 14
    %120 = vst.msk [vmem:[%s119] sm:$0x1] %vm118, %v117
    %s121 = scalar_lea.vmem %s1, 77
    %122 = vst.msk [vmem:[%s121] sm:$0x2] %vm118, %v117
    %v123 = vld [vmem:[#allocation0] sm:$0x3]
    %124 = vrot.lane.b32.xlu0 %v123, 98
    %v125 = vpop.permute.xlu0 %124
    %vm126 = vcmask 15360
    %s127 = scalar_lea.vmem %s1, 15
    %128 = vst.msk [vmem:[%s127] sm:$0x1] %vm126, %v125
    %s129 = scalar_lea.vmem %s1, 78
    %130 = vst.msk [vmem:[%s129] sm:$0x2] %vm126, %v125
    %v131 = vld [vmem:[#allocation0] sm:$0x3]
    %132 = vrot.lane.b32.xlu0 %v131, 96
    %v133 = vpop.permute.xlu0 %132
    %vm134 = vcmask 15360
    %s135 = scalar_lea.vmem %s1, 16
    %136 = vst.msk [vmem:[%s135] sm:$0x1] %vm134, %v133
    %s137 = scalar_lea.vmem %s1, 79
    %138 = vst.msk [vmem:[%s137] sm:$0x2] %vm134, %v133
    %v139 = vld [vmem:[#allocation0] sm:$0x3]
    %140 = vrot.lane.b32.xlu0 %v139, 94
    %v141 = vpop.permute.xlu0 %140
    %vm142 = vcmask 15360
    %s143 = scalar_lea.vmem %s1, 17
    %144 = vst.msk [vmem:[%s143] sm:$0x1] %vm142, %v141
    %s145 = scalar_lea.vmem %s1, 80
    %146 = vst.msk [vmem:[%s145] sm:$0x2] %vm142, %v141
    %v147 = vld [vmem:[#allocation0] sm:$0x3]
    %148 = vrot.lane.b32.xlu0 %v147, 92
    %v149 = vpop.permute.xlu0 %148
    %vm150 = vcmask 15360
    %s151 = scalar_lea.vmem %s1, 18
    %152 = vst.msk [vmem:[%s151] sm:$0x1] %vm150, %v149
    %s153 = scalar_lea.vmem %s1, 81
    %154 = vst.msk [vmem:[%s153] sm:$0x2] %vm150, %v149
    %v155 = vld [vmem:[#allocation0] sm:$0x3]
    %156 = vrot.lane.b32.xlu0 %v155, 90
    %v157 = vpop.permute.xlu0 %156
    %vm158 = vcmask 15360
    %s159 = scalar_lea.vmem %s1, 19
    %160 = vst.msk [vmem:[%s159] sm:$0x1] %vm158, %v157
    %s161 = scalar_lea.vmem %s1, 82
    %162 = vst.msk [vmem:[%s161] sm:$0x2] %vm158, %v157
    %v163 = vld [vmem:[#allocation0] sm:$0x3]
    %164 = vrot.lane.b32.xlu0 %v163, 88
    %v165 = vpop.permute.xlu0 %164
    %vm166 = vcmask 15360
    %s167 = scalar_lea.vmem %s1, 20
    %168 = vst.msk [vmem:[%s167] sm:$0x1] %vm166, %v165
    %s169 = scalar_lea.vmem %s1, 83
    %170 = vst.msk [vmem:[%s169] sm:$0x2] %vm166, %v165
    %v171 = vld [vmem:[#allocation0] sm:$0x3]
    %172 = vrot.lane.b32.xlu0 %v171, 86
    %v173 = vpop.permute.xlu0 %172
    %vm174 = vcmask 15360
    %s175 = scalar_lea.vmem %s1, 21
    %176 = vst.msk [vmem:[%s175] sm:$0x1] %vm174, %v173
    %s177 = scalar_lea.vmem %s1, 84
    %178 = vst.msk [vmem:[%s177] sm:$0x2] %vm174, %v173
    %v179 = vld [vmem:[#allocation0] sm:$0x3]
    %180 = vrot.lane.b32.xlu0 %v179, 84
    %v181 = vpop.permute.xlu0 %180
    %vm182 = vcmask 15360
    %s183 = scalar_lea.vmem %s1, 22
    %184 = vst.msk [vmem:[%s183] sm:$0x1] %vm182, %v181
    %s185 = scalar_lea.vmem %s1, 85
    %186 = vst.msk [vmem:[%s185] sm:$0x2] %vm182, %v181
    %v187 = vld [vmem:[#allocation0] sm:$0x3]
    %188 = vrot.lane.b32.xlu0 %v187, 82
    %v189 = vpop.permute.xlu0 %188
    %vm190 = vcmask 15360
    %s191 = scalar_lea.vmem %s1, 23
    %192 = vst.msk [vmem:[%s191] sm:$0x1] %vm190, %v189
    %s193 = scalar_lea.vmem %s1, 86
    %194 = vst.msk [vmem:[%s193] sm:$0x2] %vm190, %v189
    %v195 = vld [vmem:[#allocation0] sm:$0x3]
    %196 = vrot.lane.b32.xlu0 %v195, 80
    %v197 = vpop.permute.xlu0 %196
    %vm198 = vcmask 15360
    %s199 = scalar_lea.vmem %s1, 24
    %200 = vst.msk [vmem:[%s199] sm:$0x1] %vm198, %v197
    %s201 = scalar_lea.vmem %s1, 87
    %202 = vst.msk [vmem:[%s201] sm:$0x2] %vm198, %v197
    %v203 = vld [vmem:[#allocation0] sm:$0x3]
    %204 = vrot.lane.b32.xlu0 %v203, 78
    %v205 = vpop.permute.xlu0 %204
    %vm206 = vcmask 15360
    %s207 = scalar_lea.vmem %s1, 25
    %208 = vst.msk [vmem:[%s207] sm:$0x1] %vm206, %v205
    %s209 = scalar_lea.vmem %s1, 88
    %210 = vst.msk [vmem:[%s209] sm:$0x2] %vm206, %v205
    %v211 = vld [vmem:[#allocation0] sm:$0x3]
    %212 = vrot.lane.b32.xlu0 %v211, 76
    %v213 = vpop.permute.xlu0 %212
    %vm214 = vcmask 15360
    %s215 = scalar_lea.vmem %s1, 26
    %216 = vst.msk [vmem:[%s215] sm:$0x1] %vm214, %v213
    %s217 = scalar_lea.vmem %s1, 89
    %218 = vst.msk [vmem:[%s217] sm:$0x2] %vm214, %v213
    %v219 = vld [vmem:[#allocation0] sm:$0x3]
    %220 = vrot.lane.b32.xlu0 %v219, 74
    %v221 = vpop.permute.xlu0 %220
    %vm222 = vcmask 15360
    %s223 = scalar_lea.vmem %s1, 27
    %224 = vst.msk [vmem:[%s223] sm:$0x1] %vm222, %v221
    %s225 = scalar_lea.vmem %s1, 90
    %226 = vst.msk [vmem:[%s225] sm:$0x2] %vm222, %v221
    %v227 = vld [vmem:[#allocation0] sm:$0x3]
    %228 = vrot.lane.b32.xlu0 %v227, 72
    %v229 = vpop.permute.xlu0 %228
    %vm230 = vcmask 15360
    %s231 = scalar_lea.vmem %s1, 28
    %232 = vst.msk [vmem:[%s231] sm:$0x1] %vm230, %v229
    %s233 = scalar_lea.vmem %s1, 91
    %234 = vst.msk [vmem:[%s233] sm:$0x2] %vm230, %v229
    %v235 = vld [vmem:[#allocation0] sm:$0x3]
    %236 = vrot.lane.b32.xlu0 %v235, 70
    %v237 = vpop.permute.xlu0 %236
    %vm238 = vcmask 15360
    %s239 = scalar_lea.vmem %s1, 29
    %240 = vst.msk [vmem:[%s239] sm:$0x1] %vm238, %v237
    %s241 = scalar_lea.vmem %s1, 92
    %242 = vst.msk [vmem:[%s241] sm:$0x2] %vm238, %v237
    %v243 = vld [vmem:[#allocation0] sm:$0x3]
    %244 = vrot.lane.b32.xlu0 %v243, 68
    %v245 = vpop.permute.xlu0 %244
    %vm246 = vcmask 15360
    %s247 = scalar_lea.vmem %s1, 30
    %248 = vst.msk [vmem:[%s247] sm:$0x1] %vm246, %v245
    %s249 = scalar_lea.vmem %s1, 93
    %250 = vst.msk [vmem:[%s249] sm:$0x2] %vm246, %v245
    %v251 = vld [vmem:[#allocation0] sm:$0x3]
    %252 = vrot.lane.b32.xlu0 %v251, 66
    %v253 = vpop.permute.xlu0 %252
    %vm254 = vcmask 15360
    %s255 = scalar_lea.vmem %s1, 31
    %256 = vst.msk [vmem:[%s255] sm:$0x1] %vm254, %v253
    %s257 = scalar_lea.vmem %s1, 94
    %258 = vst.msk [vmem:[%s257] sm:$0x2] %vm254, %v253
    %v259 = vld [vmem:[#allocation0] sm:$0x3]
    %260 = vrot.lane.b32.xlu0 %v259, 64
    %v261 = vpop.permute.xlu0 %260
    %vm262 = vcmask 15360
    %s263 = scalar_lea.vmem %s1, 32
    %264 = vst.msk [vmem:[%s263] sm:$0x1] %vm262, %v261
    %s265 = scalar_lea.vmem %s1, 95
    %266 = vst.msk [vmem:[%s265] sm:$0x2] %vm262, %v261
    %v267 = vld [vmem:[#allocation0] sm:$0x3]
    %268 = vrot.lane.b32.xlu0 %v267, 62
    %v269 = vpop.permute.xlu0 %268
    %vm270 = vcmask 15360
    %s271 = scalar_lea.vmem %s1, 33
    %272 = vst.msk [vmem:[%s271] sm:$0x1] %vm270, %v269
    %s273 = scalar_lea.vmem %s1, 96
    %274 = vst.msk [vmem:[%s273] sm:$0x2] %vm270, %v269
    %v275 = vld [vmem:[#allocation0] sm:$0x3]
    %276 = vrot.lane.b32.xlu0 %v275, 60
    %v277 = vpop.permute.xlu0 %276
    %vm278 = vcmask 15360
    %s279 = scalar_lea.vmem %s1, 34
    %280 = vst.msk [vmem:[%s279] sm:$0x1] %vm278, %v277
    %s281 = scalar_lea.vmem %s1, 97
    %282 = vst.msk [vmem:[%s281] sm:$0x2] %vm278, %v277
    %v283 = vld [vmem:[#allocation0] sm:$0x3]
    %284 = vrot.lane.b32.xlu0 %v283, 58
    %v285 = vpop.permute.xlu0 %284
    %vm286 = vcmask 15360
    %s287 = scalar_lea.vmem %s1, 35
    %288 = vst.msk [vmem:[%s287] sm:$0x1] %vm286, %v285
    %s289 = scalar_lea.vmem %s1, 98
    %290 = vst.msk [vmem:[%s289] sm:$0x2] %vm286, %v285
    %v291 = vld [vmem:[#allocation0] sm:$0x3]
    %292 = vrot.lane.b32.xlu0 %v291, 56
    %v293 = vpop.permute.xlu0 %292
    %vm294 = vcmask 15360
    %s295 = scalar_lea.vmem %s1, 36
    %296 = vst.msk [vmem:[%s295] sm:$0x1] %vm294, %v293
    %s297 = scalar_lea.vmem %s1, 99
    %298 = vst.msk [vmem:[%s297] sm:$0x2] %vm294, %v293
    %v299 = vld [vmem:[#allocation0] sm:$0x3]
    %300 = vrot.lane.b32.xlu0 %v299, 54
    %v301 = vpop.permute.xlu0 %300
    %vm302 = vcmask 15360
    %s303 = scalar_lea.vmem %s1, 37
    %304 = vst.msk [vmem:[%s303] sm:$0x1] %vm302, %v301
    %s305 = scalar_lea.vmem %s1, 100
    %306 = vst.msk [vmem:[%s305] sm:$0x2] %vm302, %v301
    %v307 = vld [vmem:[#allocation0] sm:$0x3]
    %308 = vrot.lane.b32.xlu0 %v307, 52
    %v309 = vpop.permute.xlu0 %308
    %vm310 = vcmask 15360
    %s311 = scalar_lea.vmem %s1, 38
    %312 = vst.msk [vmem:[%s311] sm:$0x1] %vm310, %v309
    %s313 = scalar_lea.vmem %s1, 101
    %314 = vst.msk [vmem:[%s313] sm:$0x2] %vm310, %v309
    %v315 = vld [vmem:[#allocation0] sm:$0x3]
    %316 = vrot.lane.b32.xlu0 %v315, 50
    %v317 = vpop.permute.xlu0 %316
    %vm318 = vcmask 15360
    %s319 = scalar_lea.vmem %s1, 39
    %320 = vst.msk [vmem:[%s319] sm:$0x1] %vm318, %v317
    %s321 = scalar_lea.vmem %s1, 102
    %322 = vst.msk [vmem:[%s321] sm:$0x2] %vm318, %v317
    %v323 = vld [vmem:[#allocation0] sm:$0x3]
    %324 = vrot.lane.b32.xlu0 %v323, 48
    %v325 = vpop.permute.xlu0 %324
    %vm326 = vcmask 15360
    %s327 = scalar_lea.vmem %s1, 40
    %328 = vst.msk [vmem:[%s327] sm:$0x1] %vm326, %v325
    %s329 = scalar_lea.vmem %s1, 103
    %330 = vst.msk [vmem:[%s329] sm:$0x2] %vm326, %v325
    %v331 = vld [vmem:[#allocation0] sm:$0x3]
    %332 = vrot.lane.b32.xlu0 %v331, 46
    %v333 = vpop.permute.xlu0 %332
    %vm334 = vcmask 15360
    %s335 = scalar_lea.vmem %s1, 41
    %336 = vst.msk [vmem:[%s335] sm:$0x1] %vm334, %v333
    %s337 = scalar_lea.vmem %s1, 104
    %338 = vst.msk [vmem:[%s337] sm:$0x2] %vm334, %v333
    %v339 = vld [vmem:[#allocation0] sm:$0x3]
    %340 = vrot.lane.b32.xlu0 %v339, 44
    %v341 = vpop.permute.xlu0 %340
    %vm342 = vcmask 15360
    %s343 = scalar_lea.vmem %s1, 42
    %344 = vst.msk [vmem:[%s343] sm:$0x1] %vm342, %v341
    %s345 = scalar_lea.vmem %s1, 105
    %346 = vst.msk [vmem:[%s345] sm:$0x2] %vm342, %v341
    %v347 = vld [vmem:[#allocation0] sm:$0x3]
    %348 = vrot.lane.b32.xlu0 %v347, 42
    %v349 = vpop.permute.xlu0 %348
    %vm350 = vcmask 15360
    %s351 = scalar_lea.vmem %s1, 43
    %352 = vst.msk [vmem:[%s351] sm:$0x1] %vm350, %v349
    %s353 = scalar_lea.vmem %s1, 106
    %354 = vst.msk [vmem:[%s353] sm:$0x2] %vm350, %v349
    %v355 = vld [vmem:[#allocation0] sm:$0x3]
    %356 = vrot.lane.b32.xlu0 %v355, 40
    %v357 = vpop.permute.xlu0 %356
    %vm358 = vcmask 15360
    %s359 = scalar_lea.vmem %s1, 44
    %360 = vst.msk [vmem:[%s359] sm:$0x1] %vm358, %v357
    %s361 = scalar_lea.vmem %s1, 107
    %362 = vst.msk [vmem:[%s361] sm:$0x2] %vm358, %v357
    %v363 = vld [vmem:[#allocation0] sm:$0x3]
    %364 = vrot.lane.b32.xlu0 %v363, 38
    %v365 = vpop.permute.xlu0 %364
    %vm366 = vcmask 15360
    %s367 = scalar_lea.vmem %s1, 45
    %368 = vst.msk [vmem:[%s367] sm:$0x1] %vm366, %v365
    %s369 = scalar_lea.vmem %s1, 108
    %370 = vst.msk [vmem:[%s369] sm:$0x2] %vm366, %v365
    %v371 = vld [vmem:[#allocation0] sm:$0x3]
    %372 = vrot.lane.b32.xlu0 %v371, 36
    %v373 = vpop.permute.xlu0 %372
    %vm374 = vcmask 15360
    %s375 = scalar_lea.vmem %s1, 46
    %376 = vst.msk [vmem:[%s375] sm:$0x1] %vm374, %v373
    %s377 = scalar_lea.vmem %s1, 109
    %378 = vst.msk [vmem:[%s377] sm:$0x2] %vm374, %v373
    %v379 = vld [vmem:[#allocation0] sm:$0x3]
    %380 = vrot.lane.b32.xlu0 %v379, 34
    %v381 = vpop.permute.xlu0 %380
    %vm382 = vcmask 15360
    %s383 = scalar_lea.vmem %s1, 47
    %384 = vst.msk [vmem:[%s383] sm:$0x1] %vm382, %v381
    %s385 = scalar_lea.vmem %s1, 110
    %386 = vst.msk [vmem:[%s385] sm:$0x2] %vm382, %v381
    %v387 = vld [vmem:[#allocation0] sm:$0x3]
    %388 = vrot.lane.b32.xlu0 %v387, 32
    %v389 = vpop.permute.xlu0 %388
    %vm390 = vcmask 15360
    %s391 = scalar_lea.vmem %s1, 48
    %392 = vst.msk [vmem:[%s391] sm:$0x1] %vm390, %v389
    %s393 = scalar_lea.vmem %s1, 111
    %394 = vst.msk [vmem:[%s393] sm:$0x2] %vm390, %v389
    %v395 = vld [vmem:[#allocation0] sm:$0x3]
    %396 = vrot.lane.b32.xlu0 %v395, 30
    %v397 = vpop.permute.xlu0 %396
    %vm398 = vcmask 15360
    %s399 = scalar_lea.vmem %s1, 49
    %400 = vst.msk [vmem:[%s399] sm:$0x1] %vm398, %v397
    %s401 = scalar_lea.vmem %s1, 112
    %402 = vst.msk [vmem:[%s401] sm:$0x2] %vm398, %v397
    %v403 = vld [vmem:[#allocation0] sm:$0x3]
    %404 = vrot.lane.b32.xlu0 %v403, 28
    %v405 = vpop.permute.xlu0 %404
    %vm406 = vcmask 15360
    %s407 = scalar_lea.vmem %s1, 50
    %408 = vst.msk [vmem:[%s407] sm:$0x1] %vm406, %v405
    %s409 = scalar_lea.vmem %s1, 113
    %410 = vst.msk [vmem:[%s409] sm:$0x2] %vm406, %v405
    %v411 = vld [vmem:[#allocation0] sm:$0x3]
    %412 = vrot.lane.b32.xlu0 %v411, 26
    %v413 = vpop.permute.xlu0 %412
    %vm414 = vcmask 15360
    %s415 = scalar_lea.vmem %s1, 51
    %416 = vst.msk [vmem:[%s415] sm:$0x1] %vm414, %v413
    %s417 = scalar_lea.vmem %s1, 114
    %418 = vst.msk [vmem:[%s417] sm:$0x2] %vm414, %v413
    %v419 = vld [vmem:[#allocation0] sm:$0x3]
    %420 = vrot.lane.b32.xlu0 %v419, 24
    %v421 = vpop.permute.xlu0 %420
    %vm422 = vcmask 15360
    %s423 = scalar_lea.vmem %s1, 52
    %424 = vst.msk [vmem:[%s423] sm:$0x1] %vm422, %v421
    %s425 = scalar_lea.vmem %s1, 115
    %426 = vst.msk [vmem:[%s425] sm:$0x2] %vm422, %v421
    %v427 = vld [vmem:[#allocation0] sm:$0x3]
    %428 = vrot.lane.b32.xlu0 %v427, 22
    %v429 = vpop.permute.xlu0 %428
    %vm430 = vcmask 15360
    %s431 = scalar_lea.vmem %s1, 53
    %432 = vst.msk [vmem:[%s431] sm:$0x1] %vm430, %v429
    %s433 = scalar_lea.vmem %s1, 116
    %434 = vst.msk [vmem:[%s433] sm:$0x2] %vm430, %v429
    %v435 = vld [vmem:[#allocation0] sm:$0x3]
    %436 = vrot.lane.b32.xlu0 %v435, 20
    %v437 = vpop.permute.xlu0 %436
    %vm438 = vcmask 15360
    %s439 = scalar_lea.vmem %s1, 54
    %440 = vst.msk [vmem:[%s439] sm:$0x1] %vm438, %v437
    %s441 = scalar_lea.vmem %s1, 117
    %442 = vst.msk [vmem:[%s441] sm:$0x2] %vm438, %v437
    %v443 = vld [vmem:[#allocation0] sm:$0x3]
    %444 = vrot.lane.b32.xlu0 %v443, 18
    %v445 = vpop.permute.xlu0 %444
    %vm446 = vcmask 15360
    %s447 = scalar_lea.vmem %s1, 55
    %448 = vst.msk [vmem:[%s447] sm:$0x1] %vm446, %v445
    %s449 = scalar_lea.vmem %s1, 118
    %450 = vst.msk [vmem:[%s449] sm:$0x2] %vm446, %v445
    %v451 = vld [vmem:[#allocation0] sm:$0x3]
    %452 = vrot.lane.b32.xlu0 %v451, 16
    %v453 = vpop.permute.xlu0 %452
    %vm454 = vcmask 15360
    %s455 = scalar_lea.vmem %s1, 56
    %456 = vst.msk [vmem:[%s455] sm:$0x1] %vm454, %v453
    %s457 = scalar_lea.vmem %s1, 119
    %458 = vst.msk [vmem:[%s457] sm:$0x2] %vm454, %v453
    %v459 = vld [vmem:[#allocation0] sm:$0x3]
    %460 = vrot.lane.b32.xlu0 %v459, 14
    %v461 = vpop.permute.xlu0 %460
    %vm462 = vcmask 15360
    %s463 = scalar_lea.vmem %s1, 57
    %464 = vst.msk [vmem:[%s463] sm:$0x1] %vm462, %v461
    %s465 = scalar_lea.vmem %s1, 120
    %466 = vst.msk [vmem:[%s465] sm:$0x2] %vm462, %v461
    %v467 = vld [vmem:[#allocation0] sm:$0x3]
    %468 = vrot.lane.b32.xlu0 %v467, 12
    %v469 = vpop.permute.xlu0 %468
    %vm470 = vcmask 15360
    %s471 = scalar_lea.vmem %s1, 58
    %472 = vst.msk [vmem:[%s471] sm:$0x1] %vm470, %v469
    %s473 = scalar_lea.vmem %s1, 121
    %474 = vst.msk [vmem:[%s473] sm:$0x2] %vm470, %v469
    %v475 = vld [vmem:[#allocation0] sm:$0x3]
    %476 = vrot.lane.b32.xlu0 %v475, 10
    %v477 = vpop.permute.xlu0 %476
    %vm478 = vcmask 15360
    %s479 = scalar_lea.vmem %s1, 59
    %480 = vst.msk [vmem:[%s479] sm:$0x1] %vm478, %v477
    %s481 = scalar_lea.vmem %s1, 122
    %482 = vst.msk [vmem:[%s481] sm:$0x2] %vm478, %v477
    %v483 = vld [vmem:[#allocation0] sm:$0x3]
    %484 = vrot.lane.b32.xlu0 %v483, 8
    %v485 = vpop.permute.xlu0 %484
    %vm486 = vcmask 15360
    %s487 = scalar_lea.vmem %s1, 60
    %488 = vst.msk [vmem:[%s487] sm:$0x1] %vm486, %v485
    %s489 = scalar_lea.vmem %s1, 123
    %490 = vst.msk [vmem:[%s489] sm:$0x2] %vm486, %v485
    %v491 = vld [vmem:[#allocation0] sm:$0x3]
    %492 = vrot.lane.b32.xlu0 %v491, 6
    %v493 = vpop.permute.xlu0 %492
    %vm494 = vcmask 15360
    %s495 = scalar_lea.vmem %s1, 61
    %496 = vst.msk [vmem:[%s495] sm:$0x1] %vm494, %v493
    %s497 = scalar_lea.vmem %s1, 124
    %498 = vst.msk [vmem:[%s497] sm:$0x2] %vm494, %v493
    %v499 = vld [vmem:[#allocation0] sm:$0x3]
    %500 = vrot.lane.b32.xlu0 %v499, 4
    %v501 = vpop.permute.xlu0 %500
    %vm502 = vcmask 15360
    %s503 = scalar_lea.vmem %s1, 62
    %504 = vst.msk [vmem:[%s503] sm:$0x1] %vm502, %v501
    %s505 = scalar_lea.vmem %s1, 125
    %506 = vst.msk [vmem:[%s505] sm:$0x2] %vm502, %v501
    %v507 = vld [vmem:[#allocation0] sm:$0x3]
    %508 = vrot.lane.b32.xlu0 %v507, 2
    %v509 = vpop.permute.xlu0 %508
    %vm510 = vcmask 15360
    %s511 = scalar_lea.vmem %s1, 63
    %512 = vst.msk [vmem:[%s511] sm:$0x1] %vm510, %v509
    %s513 = scalar_lea.vmem %s1, 126
    %514 = vst.msk [vmem:[%s513] sm:$0x2] %vm510, %v509

// kernel: npcc_loss.1
$region0: #{npcc_loss.1}
  #allocation0 [shape = 'u32[]', space=smem, size = 0x4, offset = 0x4, fixed_abs, tag = 'smem constant byte address 0x4 - core index']
  #allocation1 [shape = 'u32[144,128]{1,0:T(1,128)}', space=vmem, size = 0x12000, scoped, tag = 'internal scratch']
  %s0 = inlined_call_operand.vmem [shape: f32[1024,128], index: 0, kind: input, shape index: {}]
  %s1 = inlined_call_operand.vmem [shape: f32[1024,128], index: 1, kind: input, shape index: {}]
  %s2 = inlined_call_operand.vmem [shape: f32[2,8,128], index: 2, kind: output, shape index: {}]
  %s3 = sld [smem:[#allocation0]]
  $region45: #{npcc_loss.1} parent=0
    _
  %s5 = ssub.s32 1, %s3
  %s6 = scalar_select 0, %s5, %s3
  loop: start=0, step=1, limit=6
  $region2: #{npcc_loss.1} parent=0 // loop_pre_header
    _
  $region3: #{npcc_loss.1} parent=0 // loop_header
    %s8 = sphi 0, %s12
    %p9 = scmp.ge.s32.totalorder %s8, 6
    %s15 = sphi 0, %s27
    %s16 = sphi 0, %s23
    %s17 = sphi 0, %s15
    %s18 = sphi 0, %s16
    %s19 = sphi 0, %s17
    %s20 = sphi 0, %s18
    %s34 = sphi 0, %s36
    %s37 = sphi 0, %s34
    %s38 = sphi 0, %s37
    %s54 = sphi 0, %s38
    %s64 = sphi 0, %s66
    %s67 = sphi 0, %s64
    %s68 = sphi 0, %s67
    %s84 = sphi 0, %s68
    %s90 = sphi 0, %s92
    %s93 = sphi 0, %s90
    %s94 = sphi 0, %s93
    %s110 = sphi 0, %s94
  $region4: #{npcc_loss.1} parent=0 // loop_header_branch
    %11 = sbr.rel (%p9) target = $region8
  $region5: #{npcc_loss.1} parent=0 // loop_body
    %s13 = ssub.s32 %s8, 1
    %s14 = ssub.s32 %s8, 2
    %s21 = sadd.s32 1, %s16
    %p22 = scmp.ge.s32.totalorder %s21, 2
    %s23 = scalar_select %p22, 0, %s21
    %s24 = sadd.s32 1, %s15
    %s25 = scalar_select %p22, %s24, %s15
    %p26 = scmp.ge.s32.totalorder %s25, 2
    %s27 = scalar_select %p26, 0, %s25
    %s28 = smul.u32 %s15, 2
    %s29 = sadd.s32 %s28, %s16
    %s30 = smul.u32 %s27, 2
    %s31 = sadd.s32 %s30, %s23
    %s32 = ssub.s32 %s29, %s31
    %p33 = scmp.eq.s32.totalorder %s32, 0
    %s35 = sadd.s32 %s34, 1
    %s36 = scalar_select %p33, %s34, %s35
    %p39 = pneg %p33
    %p40 = scmp.eq.s32.totalorder %s8, 3
    %p41 = por %p39, %p40
    %p42 = scmp.ne.s32.totalorder %s34, %s37
    %p43 = scmp.eq.s32.totalorder %s8, 0
    %p44 = por %p42, %p43
    %p45 = scmp.ne.s32.totalorder %s34, %s37
    %p46 = scmp.eq.s32.totalorder %s13, 3
    %p47 = por %p45, %p46
    %p48 = scmp.ne.s32.totalorder %s37, %s38
    %p49 = scmp.eq.s32.totalorder %s13, 0
    %p50 = por %p48, %p49
    %p51 = scmp.ne.s32.totalorder %s37, %s38
    %p52 = scmp.eq.s32.totalorder %s14, 3
    %p53 = por %p51, %p52
    %p55 = scmp.ne.s32.totalorder %s38, %s54
    %p56 = scmp.eq.s32.totalorder %s14, 0
    %p57 = por %p55, %p56
    %s58 = smul.u32 %s15, 2
    %s59 = sadd.s32 %s58, %s16
    %s60 = smul.u32 %s27, 2
    %s61 = sadd.s32 %s60, %s23
    %s62 = ssub.s32 %s59, %s61
    %p63 = scmp.eq.s32.totalorder %s62, 0
    %s65 = sadd.s32 %s64, 1
    %s66 = scalar_select %p63, %s64, %s65
    %p69 = pneg %p63
    %p70 = scmp.eq.s32.totalorder %s8, 3
    %p71 = por %p69, %p70
    %p72 = scmp.ne.s32.totalorder %s64, %s67
    %p73 = scmp.eq.s32.totalorder %s8, 0
    %p74 = por %p72, %p73
    %p75 = scmp.ne.s32.totalorder %s64, %s67
    %p76 = scmp.eq.s32.totalorder %s13, 3
    %p77 = por %p75, %p76
    %p78 = scmp.ne.s32.totalorder %s67, %s68
    %p79 = scmp.eq.s32.totalorder %s13, 0
    %p80 = por %p78, %p79
    %p81 = scmp.ne.s32.totalorder %s67, %s68
    %p82 = scmp.eq.s32.totalorder %s14, 3
    %p83 = por %p81, %p82
    %p85 = scmp.ne.s32.totalorder %s68, %s84
    %p86 = scmp.eq.s32.totalorder %s14, 0
    %p87 = por %p85, %p86
    %s88 = ssub.s32 %s15, %s27
    %p89 = scmp.eq.s32.totalorder %s88, 0
    %s91 = sadd.s32 %s90, 1
    %s92 = scalar_select %p89, %s90, %s91
    %p95 = pneg %p89
    %p96 = scmp.eq.s32.totalorder %s8, 3
    %p97 = por %p95, %p96
    %p98 = scmp.ne.s32.totalorder %s90, %s93
    %p99 = scmp.eq.s32.totalorder %s8, 0
    %p100 = por %p98, %p99
    %p101 = scmp.ne.s32.totalorder %s90, %s93
    %p102 = scmp.eq.s32.totalorder %s13, 3
    %p103 = por %p101, %p102
    %p104 = scmp.ne.s32.totalorder %s93, %s94
    %p105 = scmp.eq.s32.totalorder %s13, 0
    %p106 = por %p104, %p105
    %p107 = scmp.ne.s32.totalorder %s93, %s94
    %p108 = scmp.eq.s32.totalorder %s14, 3
    %p109 = por %p107, %p108
    %p111 = scmp.ne.s32.totalorder %s94, %s110
    %p112 = scmp.eq.s32.totalorder %s14, 0
    %p113 = por %p111, %p112
    %p114 = scmp.le.s32.totalorder 1, %s8
    %p115 = scmp.lt.s32.totalorder %s8, 5
    %p116 = pnand %p114, %p115
    %p117 = pneg %p116
    // Predicated region
    $region9: #{npcc_loss.1} parent=5 // pred_check
      _
    $region10: #{npcc_loss.1} parent=5 // pred_check_branch
      %119 = sbr.rel (%p116) target = $region12
    $region11: #{npcc_loss.1} parent=5 // pred_region
      %s120 = ssub.s32 %s8, 1
    $region12: #{npcc_loss.1} parent=5 // pred_fallthru
      _
    %p121 = scmp.lt.s32.totalorder %s8, 4
    // Predicated region
    $region13: #{npcc_loss.1} parent=5 // pred_check
      %p122 = pneg %p121
    $region14: #{npcc_loss.1} parent=5 // pred_check_branch
      %124 = sbr.rel (%p122) target = $region16
    $region15: #{npcc_loss.1} parent=5 // pred_region
      // Predicated region
      $region17: #{npcc_loss.1} parent=15 // pred_check
        %p125 = pneg %p44
      $region18: #{npcc_loss.1} parent=15 // pred_check_branch
        %127 = sbr.rel (%p125) target = $region20
      $region19: #{npcc_loss.1} parent=15 // pred_region
        %s128 = smul.u32 %s15, 2
        %s129 = sadd.s32 %s128, %s16
        %s130 = smul.u32 32, %s129
        %p131 = scmp.lt.s32.totalorder %s130, 127
        %s132 = scalar_select %p131, %s130, 127
        %s133 = smul.addr %s132, 8
        %s134 = scalar_lea.vmem %s0, %s133
        %s135 = smul.u32 %s15, 2
        %s136 = sadd.s32 %s135, %s16
        %s137 = smul.u32 32, %s136
      $region20: #{npcc_loss.1} parent=15 // pred_fallthru
        _
      // Predicated region
      $region21: #{npcc_loss.1} parent=15 // pred_check
        %p138 = pneg %p74
      $region22: #{npcc_loss.1} parent=15 // pred_check_branch
        %140 = sbr.rel (%p138) target = $region24
      $region23: #{npcc_loss.1} parent=15 // pred_region
        %s141 = smul.u32 %s15, 2
        %s142 = sadd.s32 %s141, %s16
        %s143 = smul.u32 32, %s142
        %p144 = scmp.lt.s32.totalorder %s143, 127
        %s145 = scalar_select %p144, %s143, 127
        %s146 = smul.addr %s145, 8
        %s147 = scalar_lea.vmem %s1, %s146
        %s148 = smul.u32 %s15, 2
        %s149 = sadd.s32 %s148, %s16
        %s150 = smul.u32 32, %s149
      $region24: #{npcc_loss.1} parent=15 // pred_fallthru
        _
    $region16: #{npcc_loss.1} parent=5 // pred_fallthru
      _
    %p151 = scmp.le.s32.totalorder 1, %s8
    %p152 = scmp.lt.s32.totalorder %s8, 5
    %p153 = pnand %p151, %p152
    %p154 = pneg %p153
    // Predicated region
    $region25: #{npcc_loss.1} parent=5 // pred_check
      _
    $region26: #{npcc_loss.1} parent=5 // pred_check_branch
      %156 = sbr.rel (%p153) target = $region28
    $region27: #{npcc_loss.1} parent=5 // pred_region
      %s157 = ssub.s32 %s8, 1
      %s158 = smul.u32 %s17, 2
      %s159 = sadd.s32 %s158, %s18
      %s160 = smul.u32 32, %s159
      %p161 = scmp.lt.s32.totalorder %s160, 127
      %s162 = scalar_select %p161, %s160, 127
      %s163 = smul.addr %s162, 8
      %s164 = scalar_lea.vmem %s0, %s163
      %p165 = pneg %p50
      %p166 = pneg %p47
      %s167 = smul.u32 %s17, 2
      %s168 = sadd.s32 %s167, %s18
      %s169 = smul.u32 32, %s168
      %p170 = scmp.lt.s32.totalorder %s169, 127
      %s171 = scalar_select %p170, %s169, 127
      %s172 = smul.addr %s171, 8
      %s173 = scalar_lea.vmem %s1, %s172
      %p174 = pneg %p80
      %p175 = pneg %p77
      %p176 = pneg %p106
      %p177 = pneg %p103
      %p178 = scmp.lt.s32.totalorder %s17, 1
      %s179 = scalar_select %p178, %s17, 1
      %s180 = smul.addr %s179, 8
      %s181 = scalar_lea.vmem %s2, %s180
      %s182 = smul.u32 %s17, 2
      %s183 = sadd.s32 %s182, %s18
      %s184 = smul.u32 32, %s183
      %p185 = scmp.lt.s32.totalorder %s184, 127
      %s186 = scalar_select %p185, %s184, 127
      %s187 = smul.addr %s186, 8
      %s188 = scalar_lea.vmem %s0, %s187
      %s189 = smul.u32 %s17, 2
      %s190 = sadd.s32 %s189, %s18
      %s191 = smul.u32 32, %s190
      %s192 = smul.u32 %s17, 2
      %s193 = sadd.s32 %s192, %s18
      %s194 = smul.u32 32, %s193
      %p195 = scmp.lt.s32.totalorder %s194, 127
      %s196 = scalar_select %p195, %s194, 127
      %s197 = smul.addr %s196, 8
      %s198 = scalar_lea.vmem %s1, %s197
      %s199 = smul.u32 %s17, 2
      %s200 = sadd.s32 %s199, %s18
      %s201 = smul.u32 32, %s200
      %p202 = scmp.lt.s32.totalorder %s17, 1
      %s203 = scalar_select %p202, %s17, 1
      %s204 = smul.addr %s203, 8
      %s205 = scalar_lea.vmem %s2, %s204
      %p206 = scmp.eq.s32.totalorder %s18, 0
      // Predicated region
      $region29: #{npcc_loss.1} parent=27 // pred_check
        %p207 = pneg %p206
      $region30: #{npcc_loss.1} parent=27 // pred_check_branch
        %209 = sbr.rel (%p207) target = $region32
      $region31: #{npcc_loss.1} parent=27 // pred_region
        %210 = vst [vmem:[%s205] sm:$0xff] 0.0
      $region32: #{npcc_loss.1} parent=27 // pred_fallthru
        _
      %v211 = vld [vmem:[%s188] sm:$0xff]
      %v212 = vld [vmem:[%s188 + $0x8] sm:$0xff]
      %v213 = vld [vmem:[%s188 + $0x10] sm:$0xff]
      %v214 = vld [vmem:[%s188 + $0x18] sm:$0xff]
      %v215 = vld [vmem:[%s188 + $0x20] sm:$0xff]
      %v216 = vld [vmem:[%s188 + $0x28] sm:$0xff]
      %v217 = vld [vmem:[%s188 + $0x30] sm:$0xff]
      %v218 = vld [vmem:[%s188 + $0x38] sm:$0xff]
      %v219 = vld [vmem:[%s188 + $0x40] sm:$0xff]
      %v220 = vld [vmem:[%s188 + $0x48] sm:$0xff]
      %v221 = vld [vmem:[%s188 + $0x50] sm:$0xff]
      %v222 = vld [vmem:[%s188 + $0x58] sm:$0xff]
      %v223 = vld [vmem:[%s188 + $0x60] sm:$0xff]
      %v224 = vld [vmem:[%s188 + $0x68] sm:$0xff]
      %v225 = vld [vmem:[%s188 + $0x70] sm:$0xff]
      %v226 = vld [vmem:[%s188 + $0x78] sm:$0xff]
      %v227 = vld [vmem:[%s188 + $0x80] sm:$0xff]
      %v228 = vld [vmem:[%s188 + $0x88] sm:$0xff]
      %v229 = vld [vmem:[%s188 + $0x90] sm:$0xff]
      %v230 = vld [vmem:[%s188 + $0x98] sm:$0xff]
      %v231 = vld [vmem:[%s188 + $0xa0] sm:$0xff]
      %v232 = vld [vmem:[%s188 + $0xa8] sm:$0xff]
      %v233 = vld [vmem:[%s188 + $0xb0] sm:$0xff]
      %v234 = vld [vmem:[%s188 + $0xb8] sm:$0xff]
      %v235 = vld [vmem:[%s188 + $0xc0] sm:$0xff]
      %v236 = vld [vmem:[%s188 + $0xc8] sm:$0xff]
      %v237 = vld [vmem:[%s188 + $0xd0] sm:$0xff]
      %v238 = vld [vmem:[%s188 + $0xd8] sm:$0xff]
      %v239 = vld [vmem:[%s188 + $0xe0] sm:$0xff]
      %v240 = vld [vmem:[%s188 + $0xe8] sm:$0xff]
      %v241 = vld [vmem:[%s188 + $0xf0] sm:$0xff]
      %v242 = vld [vmem:[%s188 + $0xf8] sm:$0xff]
      %v243 = vld [vmem:[%s198] sm:$0xff]
      %v244 = vld [vmem:[%s198 + $0x8] sm:$0xff]
      %v245 = vld [vmem:[%s198 + $0x10] sm:$0xff]
      %v246 = vld [vmem:[%s198 + $0x18] sm:$0xff]
      %v247 = vld [vmem:[%s198 + $0x20] sm:$0xff]
      %v248 = vld [vmem:[%s198 + $0x28] sm:$0xff]
      %v249 = vld [vmem:[%s198 + $0x30] sm:$0xff]
      %v250 = vld [vmem:[%s198 + $0x38] sm:$0xff]
      %v251 = vld [vmem:[%s198 + $0x40] sm:$0xff]
      %v252 = vld [vmem:[%s198 + $0x48] sm:$0xff]
      %v253 = vld [vmem:[%s198 + $0x50] sm:$0xff]
      %v254 = vld [vmem:[%s198 + $0x58] sm:$0xff]
      %v255 = vld [vmem:[%s198 + $0x60] sm:$0xff]
      %v256 = vld [vmem:[%s198 + $0x68] sm:$0xff]
      %v257 = vld [vmem:[%s198 + $0x70] sm:$0xff]
      %v258 = vld [vmem:[%s198 + $0x78] sm:$0xff]
      %v259 = vld [vmem:[%s198 + $0x80] sm:$0xff]
      %v260 = vld [vmem:[%s198 + $0x88] sm:$0xff]
      %v261 = vld [vmem:[%s198 + $0x90] sm:$0xff]
      %v262 = vld [vmem:[%s198 + $0x98] sm:$0xff]
      %v263 = vld [vmem:[%s198 + $0xa0] sm:$0xff]
      %v264 = vld [vmem:[%s198 + $0xa8] sm:$0xff]
      %v265 = vld [vmem:[%s198 + $0xb0] sm:$0xff]
      %v266 = vld [vmem:[%s198 + $0xb8] sm:$0xff]
      %v267 = vld [vmem:[%s198 + $0xc0] sm:$0xff]
      %v268 = vld [vmem:[%s198 + $0xc8] sm:$0xff]
      %v269 = vld [vmem:[%s198 + $0xd0] sm:$0xff]
      %v270 = vld [vmem:[%s198 + $0xd8] sm:$0xff]
      %v271 = vld [vmem:[%s198 + $0xe0] sm:$0xff]
      %v272 = vld [vmem:[%s198 + $0xe8] sm:$0xff]
      %v273 = vld [vmem:[%s198 + $0xf0] sm:$0xff]
      %v274 = vld [vmem:[%s198 + $0xf8] sm:$0xff]
      %v275 = vlaneseq
      %v276 = vshrl.u32 %v275, 7
      %v277 = vsub.s32 0, %v276
      %v278 = vrot.slane %v211, %v277
      %v279 = vsub.f32 %v211, %v278
      %v280 = vsub.f32 %v212, %v278
      %v281 = vsub.f32 %v213, %v278
      %v282 = vsub.f32 %v214, %v278
      %v283 = vsub.f32 %v215, %v278
      %v284 = vsub.f32 %v216, %v278
      %v285 = vsub.f32 %v217, %v278
      %v286 = vsub.f32 %v218, %v278
      %v287 = vsub.f32 %v219, %v278
      %v288 = vsub.f32 %v220, %v278
      %v289 = vsub.f32 %v221, %v278
      %v290 = vsub.f32 %v222, %v278
      %v291 = vsub.f32 %v223, %v278
      %v292 = vsub.f32 %v224, %v278
      %v293 = vsub.f32 %v225, %v278
      %v294 = vsub.f32 %v226, %v278
      %v295 = vsub.f32 %v227, %v278
      %v296 = vsub.f32 %v228, %v278
      %v297 = vsub.f32 %v229, %v278
      %v298 = vsub.f32 %v230, %v278
      %v299 = vsub.f32 %v231, %v278
      %v300 = vsub.f32 %v232, %v278
      %v301 = vsub.f32 %v233, %v278
      %v302 = vsub.f32 %v234, %v278
      %v303 = vsub.f32 %v235, %v278
      %v304 = vsub.f32 %v236, %v278
      %v305 = vsub.f32 %v237, %v278
      %v306 = vsub.f32 %v238, %v278
      %v307 = vsub.f32 %v239, %v278
      %v308 = vsub.f32 %v240, %v278
      %v309 = vsub.f32 %v241, %v278
      %v310 = vsub.f32 %v242, %v278
      %v311 = vlaneseq
      %v312 = vshrl.u32 %v311, 7
      %v313 = vsub.s32 0, %v312
      %v314 = vrot.slane %v243, %v313
      %v315 = vsub.f32 %v243, %v314
      %v316 = vsub.f32 %v244, %v314
      %v317 = vsub.f32 %v245, %v314
      %v318 = vsub.f32 %v246, %v314
      %v319 = vsub.f32 %v247, %v314
      %v320 = vsub.f32 %v248, %v314
      %v321 = vsub.f32 %v249, %v314
      %v322 = vsub.f32 %v250, %v314
      %v323 = vsub.f32 %v251, %v314
      %v324 = vsub.f32 %v252, %v314
      %v325 = vsub.f32 %v253, %v314
      %v326 = vsub.f32 %v254, %v314
      %v327 = vsub.f32 %v255, %v314
      %v328 = vsub.f32 %v256, %v314
      %v329 = vsub.f32 %v257, %v314
      %v330 = vsub.f32 %v258, %v314
      %v331 = vsub.f32 %v259, %v314
      %v332 = vsub.f32 %v260, %v314
      %v333 = vsub.f32 %v261, %v314
      %v334 = vsub.f32 %v262, %v314
      %v335 = vsub.f32 %v263, %v314
      %v336 = vsub.f32 %v264, %v314
      %v337 = vsub.f32 %v265, %v314
      %v338 = vsub.f32 %v266, %v314
      %v339 = vsub.f32 %v267, %v314
      %v340 = vsub.f32 %v268, %v314
      %v341 = vsub.f32 %v269, %v314
      %v342 = vsub.f32 %v270, %v314
      %v343 = vsub.f32 %v271, %v314
      %v344 = vsub.f32 %v272, %v314
      %v345 = vsub.f32 %v273, %v314
      %v346 = vsub.f32 %v274, %v314
      %v347 = vadd.f32 %v279, %v280
      %v348 = vadd.f32 %v347, %v281
      %v349 = vadd.f32 %v348, %v282
      %v350 = vadd.f32 %v349, %v283
      %v351 = vadd.f32 %v350, %v284
      %v352 = vadd.f32 %v351, %v285
      %v353 = vadd.f32 %v352, %v286
      %v354 = vadd.f32 %v353, %v287
      %v355 = vadd.f32 %v354, %v288
      %v356 = vadd.f32 %v355, %v289
      %v357 = vadd.f32 %v356, %v290
      %v358 = vadd.f32 %v357, %v291
      %v359 = vadd.f32 %v358, %v292
      %v360 = vadd.f32 %v359, %v293
      %v361 = vadd.f32 %v360, %v294
      %v362 = vadd.f32 %v361, %v295
      %v363 = vadd.f32 %v362, %v296
      %v364 = vadd.f32 %v363, %v297
      %v365 = vadd.f32 %v364, %v298
      %v366 = vadd.f32 %v365, %v299
      %v367 = vadd.f32 %v366, %v300
      %v368 = vadd.f32 %v367, %v301
      %v369 = vadd.f32 %v368, %v302
      %v370 = vadd.f32 %v369, %v303
      %v371 = vadd.f32 %v370, %v304
      %v372 = vadd.f32 %v371, %v305
      %v373 = vadd.f32 %v372, %v306
      %v374 = vadd.f32 %v373, %v307
      %v375 = vadd.f32 %v374, %v308
      %v376 = vadd.f32 %v375, %v309
      %v377 = vadd.f32 %v376, %v310
      %v378 = vrot.slane %v377, 4
      %v379 = vadd.f32 %v377, %v378
      %v380 = vrot.slane %v379, 2
      %v381 = vadd.f32 %v379, %v380
      %v382 = vrot.slane %v381, 1
      %v383 = vadd.f32 %v381, %v382
      %v384 = vadd.f32 %v315, %v316
      %v385 = vadd.f32 %v384, %v317
      %v386 = vadd.f32 %v385, %v318
      %v387 = vadd.f32 %v386, %v319
      %v388 = vadd.f32 %v387, %v320
      %v389 = vadd.f32 %v388, %v321
      %v390 = vadd.f32 %v389, %v322
      %v391 = vadd.f32 %v390, %v323
      %v392 = vadd.f32 %v391, %v324
      %v393 = vadd.f32 %v392, %v325
      %v394 = vadd.f32 %v393, %v326
      %v395 = vadd.f32 %v394, %v327
      %v396 = vadd.f32 %v395, %v328
      %v397 = vadd.f32 %v396, %v329
      %v398 = vadd.f32 %v397, %v330
      %v399 = vadd.f32 %v398, %v331
      %v400 = vadd.f32 %v399, %v332
      %v401 = vadd.f32 %v400, %v333
      %v402 = vadd.f32 %v401, %v334
      %v403 = vadd.f32 %v402, %v335
      %v404 = vadd.f32 %v403, %v336
      %v405 = vadd.f32 %v404, %v337
      %v406 = vadd.f32 %v405, %v338
      %v407 = vadd.f32 %v406, %v339
      %v408 = vadd.f32 %v407, %v340
      %v409 = vadd.f32 %v408, %v341
      %v410 = vadd.f32 %v409, %v342
      %v411 = vadd.f32 %v410, %v343
      %v412 = vadd.f32 %v411, %v344
      %v413 = vadd.f32 %v412, %v345
      %v414 = vadd.f32 %v413, %v346
      %v415 = vrot.slane %v414, 4
      %v416 = vadd.f32 %v414, %v415
      %v417 = vrot.slane %v416, 2
      %v418 = vadd.f32 %v416, %v417
      %v419 = vrot.slane %v418, 1
      %v420 = vadd.f32 %v418, %v419
      %v421 = vmul.f32 %v279, %v279
      %v422 = vmul.f32 %v280, %v280
      %v423 = vmul.f32 %v281, %v281
      %v424 = vmul.f32 %v282, %v282
      %v425 = vmul.f32 %v283, %v283
      %v426 = vmul.f32 %v284, %v284
      %v427 = vmul.f32 %v285, %v285
      %v428 = vmul.f32 %v286, %v286
      %v429 = vmul.f32 %v287, %v287
      %v430 = vmul.f32 %v288, %v288
      %v431 = vmul.f32 %v289, %v289
      %v432 = vmul.f32 %v290, %v290
      %v433 = vmul.f32 %v291, %v291
      %v434 = vmul.f32 %v292, %v292
      %v435 = vmul.f32 %v293, %v293
      %v436 = vmul.f32 %v294, %v294
      %v437 = vmul.f32 %v295, %v295
      %v438 = vmul.f32 %v296, %v296
      %v439 = vmul.f32 %v297, %v297
      %v440 = vmul.f32 %v298, %v298
      %v441 = vmul.f32 %v299, %v299
      %v442 = vmul.f32 %v300, %v300
      %v443 = vmul.f32 %v301, %v301
      %v444 = vmul.f32 %v302, %v302
      %v445 = vmul.f32 %v303, %v303
      %v446 = vmul.f32 %v304, %v304
      %v447 = vmul.f32 %v305, %v305
      %v448 = vmul.f32 %v306, %v306
      %v449 = vmul.f32 %v307, %v307
      %v450 = vmul.f32 %v308, %v308
      %v451 = vmul.f32 %v309, %v309
      %v452 = vmul.f32 %v310, %v310
      %v453 = vadd.f32 %v421, %v422
      %v454 = vadd.f32 %v453, %v423
      %v455 = vadd.f32 %v454, %v424
      %v456 = vadd.f32 %v455, %v425
      %v457 = vadd.f32 %v456, %v426
      %v458 = vadd.f32 %v457, %v427
      %v459 = vadd.f32 %v458, %v428
      %v460 = vadd.f32 %v459, %v429
      %v461 = vadd.f32 %v460, %v430
      %v462 = vadd.f32 %v461, %v431
      %v463 = vadd.f32 %v462, %v432
      %v464 = vadd.f32 %v463, %v433
      %v465 = vadd.f32 %v464, %v434
      %v466 = vadd.f32 %v465, %v435
      %v467 = vadd.f32 %v466, %v436
      %v468 = vadd.f32 %v467, %v437
      %v469 = vadd.f32 %v468, %v438
      %v470 = vadd.f32 %v469, %v439
      %v471 = vadd.f32 %v470, %v440
      %v472 = vadd.f32 %v471, %v441
      %v473 = vadd.f32 %v472, %v442
      %v474 = vadd.f32 %v473, %v443
      %v475 = vadd.f32 %v474, %v444
      %v476 = vadd.f32 %v475, %v445
      %v477 = vadd.f32 %v476, %v446
      %v478 = vadd.f32 %v477, %v447
      %v479 = vadd.f32 %v478, %v448
      %v480 = vadd.f32 %v479, %v449
      %v481 = vadd.f32 %v480, %v450
      %v482 = vadd.f32 %v481, %v451
      %v483 = vadd.f32 %v482, %v452
      %v484 = vrot.slane %v483, 4
      %v485 = vadd.f32 %v483, %v484
      %v486 = vrot.slane %v485, 2
      %v487 = vadd.f32 %v485, %v486
      %v488 = vrot.slane %v487, 1
      %v489 = vadd.f32 %v487, %v488
      %v490 = vmul.f32 %v315, %v315
      %v491 = vmul.f32 %v316, %v316
      %v492 = vmul.f32 %v317, %v317
      %v493 = vmul.f32 %v318, %v318
      %v494 = vmul.f32 %v319, %v319
      %v495 = vmul.f32 %v320, %v320
      %v496 = vmul.f32 %v321, %v321
      %v497 = vmul.f32 %v322, %v322
      %v498 = vmul.f32 %v323, %v323
      %v499 = vmul.f32 %v324, %v324
      %v500 = vmul.f32 %v325, %v325
      %v501 = vmul.f32 %v326, %v326
      %v502 = vmul.f32 %v327, %v327
      %v503 = vmul.f32 %v328, %v328
      %v504 = vmul.f32 %v329, %v329
      %v505 = vmul.f32 %v330, %v330
      %v506 = vmul.f32 %v331, %v331
      %v507 = vmul.f32 %v332, %v332
      %v508 = vmul.f32 %v333, %v333
      %v509 = vmul.f32 %v334, %v334
      %v510 = vmul.f32 %v335, %v335
      %v511 = vmul.f32 %v336, %v336
      %v512 = vmul.f32 %v337, %v337
      %v513 = vmul.f32 %v338, %v338
      %v514 = vmul.f32 %v339, %v339
      %v515 = vmul.f32 %v340, %v340
      %v516 = vmul.f32 %v341, %v341
      %v517 = vmul.f32 %v342, %v342
      %v518 = vmul.f32 %v343, %v343
      %v519 = vmul.f32 %v344, %v344
      %v520 = vmul.f32 %v345, %v345
      %v521 = vmul.f32 %v346, %v346
      %v522 = vadd.f32 %v490, %v491
      %v523 = vadd.f32 %v522, %v492
      %v524 = vadd.f32 %v523, %v493
      %v525 = vadd.f32 %v524, %v494
      %v526 = vadd.f32 %v525, %v495
      %v527 = vadd.f32 %v526, %v496
      %v528 = vadd.f32 %v527, %v497
      %v529 = vadd.f32 %v528, %v498
      %v530 = vadd.f32 %v529, %v499
      %v531 = vadd.f32 %v530, %v500
      %v532 = vadd.f32 %v531, %v501
      %v533 = vadd.f32 %v532, %v502
      %v534 = vadd.f32 %v533, %v503
      %v535 = vadd.f32 %v534, %v504
      %v536 = vadd.f32 %v535, %v505
      %v537 = vadd.f32 %v536, %v506
      %v538 = vadd.f32 %v537, %v507
      %v539 = vadd.f32 %v538, %v508
      %v540 = vadd.f32 %v539, %v509
      %v541 = vadd.f32 %v540, %v510
      %v542 = vadd.f32 %v541, %v511
      %v543 = vadd.f32 %v542, %v512
      %v544 = vadd.f32 %v543, %v513
      %v545 = vadd.f32 %v544, %v514
      %v546 = vadd.f32 %v545, %v515
      %v547 = vadd.f32 %v546, %v516
      %v548 = vadd.f32 %v547, %v517
      %v549 = vadd.f32 %v548, %v518
      %v550 = vadd.f32 %v549, %v519
      %v551 = vadd.f32 %v550, %v520
      %v552 = vadd.f32 %v551, %v521
      %v553 = vrot.slane %v552, 4
      %v554 = vadd.f32 %v552, %v553
      %v555 = vrot.slane %v554, 2
      %v556 = vadd.f32 %v554, %v555
      %v557 = vrot.slane %v556, 1
      %v558 = vadd.f32 %v556, %v557
      %v559 = vmul.f32 %v279, %v315
      %v560 = vmul.f32 %v280, %v316
      %v561 = vmul.f32 %v281, %v317
      %v562 = vmul.f32 %v282, %v318
      %v563 = vmul.f32 %v283, %v319
      %v564 = vmul.f32 %v284, %v320
      %v565 = vmul.f32 %v285, %v321
      %v566 = vmul.f32 %v286, %v322
      %v567 = vmul.f32 %v287, %v323
      %v568 = vmul.f32 %v288, %v324
      %v569 = vmul.f32 %v289, %v325
      %v570 = vmul.f32 %v290, %v326
      %v571 = vmul.f32 %v291, %v327
      %v572 = vmul.f32 %v292, %v328
      %v573 = vmul.f32 %v293, %v329
      %v574 = vmul.f32 %v294, %v330
      %v575 = vmul.f32 %v295, %v331
      %v576 = vmul.f32 %v296, %v332
      %v577 = vmul.f32 %v297, %v333
      %v578 = vmul.f32 %v298, %v334
      %v579 = vmul.f32 %v299, %v335
      %v580 = vmul.f32 %v300, %v336
      %v581 = vmul.f32 %v301, %v337
      %v582 = vmul.f32 %v302, %v338
      %v583 = vmul.f32 %v303, %v339
      %v584 = vmul.f32 %v304, %v340
      %v585 = vmul.f32 %v305, %v341
      %v586 = vmul.f32 %v306, %v342
      %v587 = vmul.f32 %v307, %v343
      %v588 = vmul.f32 %v308, %v344
      %v589 = vmul.f32 %v309, %v345
      %v590 = vmul.f32 %v310, %v346
      %v591 = vadd.f32 %v559, %v560
      %v592 = vadd.f32 %v591, %v561
      %v593 = vadd.f32 %v592, %v562
      %v594 = vadd.f32 %v593, %v563
      %v595 = vadd.f32 %v594, %v564
      %v596 = vadd.f32 %v595, %v565
      %v597 = vadd.f32 %v596, %v566
      %v598 = vadd.f32 %v597, %v567
      %v599 = vadd.f32 %v598, %v568
      %v600 = vadd.f32 %v599, %v569
      %v601 = vadd.f32 %v600, %v570
      %v602 = vadd.f32 %v601, %v571
      %v603 = vadd.f32 %v602, %v572
      %v604 = vadd.f32 %v603, %v573
      %v605 = vadd.f32 %v604, %v574
      %v606 = vadd.f32 %v605, %v575
      %v607 = vadd.f32 %v606, %v576
      %v608 = vadd.f32 %v607, %v577
      %v609 = vadd.f32 %v608, %v578
      %v610 = vadd.f32 %v609, %v579
      %v611 = vadd.f32 %v610, %v580
      %v612 = vadd.f32 %v611, %v581
      %v613 = vadd.f32 %v612, %v582
      %v614 = vadd.f32 %v613, %v583
      %v615 = vadd.f32 %v614, %v584
      %v616 = vadd.f32 %v615, %v585
      %v617 = vadd.f32 %v616, %v586
      %v618 = vadd.f32 %v617, %v587
      %v619 = vadd.f32 %v618, %v588
      %v620 = vadd.f32 %v619, %v589
      %v621 = vadd.f32 %v620, %v590
      %v622 = vrot.slane %v621, 4
      %v623 = vadd.f32 %v621, %v622
      %v624 = vrot.slane %v623, 2
      %v625 = vadd.f32 %v623, %v624
      %v626 = vrot.slane %v625, 1
      %v627 = vadd.f32 %v625, %v626
      %v628 = vmul.f32 %v383, 0.00390625
      %v629 = vmul.f32 %v420, 0.00390625
      %v630 = vadd.f32 %v211, %v628
      %v631 = vadd.f32 %v243, %v629
      %v632 = vmul.f32 %v628, 256.0
      %v633 = vmul.f32 %v632, %v628
      %v634 = vsub.f32 %v489, %v633
      %v635 = vmax.f32 %v634, 0.0
      %v636 = vmul.f32 %v629, 256.0
      %v637 = vmul.f32 %v636, %v629
      %v638 = vsub.f32 %v558, %v637
      %v639 = vmax.f32 %v638, 0.0
      %v640 = vmul.f32 %v632, %v629
      %v641 = vsub.f32 %v627, %v640
      %s642 = scvt.s32.f32 %s18
      %s643 = smul.f32 %s642, 256.0
      %s644 = sadd.f32 %s643, 256.0
      %v645 = vstv %s644
      %v646 = vrcp.pop %v645
      %s647 = vtos %v646
      %s648 = smul.f32 256.0, %s647
      %s649 = smul.f32 %s643, %s648
      %v650 = vld [vmem:[%s205] sm:$0x1]
      %v651 = vld [vmem:[%s205 + $0x1] sm:$0x1]
      %v652 = vsub.f32 %v630, %v650
      %v653 = vsub.f32 %v631, %v651
      %v654 = vstv %s648
      %v655 = vmul.f32 %v652, %v654
      %v656 = vadd.f32 %v650, %v655
      %657 = vst [vmem:[%s205] sm:$0x1] %v656
      %v658 = vmul.f32 %v653, %v654
      %v659 = vadd.f32 %v651, %v658
      %660 = vst [vmem:[%s205 + $0x1] sm:$0x1] %v659
      %v661 = vld [vmem:[%s205 + $0x2] sm:$0x1]
      %v662 = vadd.f32 %v661, %v635
      %v663 = vmul.f32 %v652, %v652
      %v664 = vstv %s649
      %v665 = vmul.f32 %v663, %v664
      %v666 = vadd.f32 %v662, %v665
      %667 = vst [vmem:[%s205 + $0x2] sm:$0x1] %v666
      %v668 = vld [vmem:[%s205 + $0x3] sm:$0x1]
      %v669 = vadd.f32 %v668, %v639
      %v670 = vmul.f32 %v653, %v653
      %v671 = vmul.f32 %v670, %v664
      %v672 = vadd.f32 %v669, %v671
      %673 = vst [vmem:[%s205 + $0x3] sm:$0x1] %v672
      %v674 = vld [vmem:[%s205 + $0x4] sm:$0x1]
      %v675 = vadd.f32 %v674, %v641
      %v676 = vmul.f32 %v652, %v653
      %v677 = vmul.f32 %v676, %v664
      %v678 = vadd.f32 %v675, %v677
      %679 = vst [vmem:[%s205 + $0x4] sm:$0x1] %v678
      %p680 = scmp.lt.s32.totalorder %s17, 1
      %s681 = scalar_select %p680, %s17, 1
      %s682 = smul.addr %s681, 8
      %s683 = scalar_lea.vmem %s2, %s682
      // Predicated region
      $region33: #{npcc_loss.1} parent=27 // pred_check
        %p684 = pneg %p103
      $region34: #{npcc_loss.1} parent=27 // pred_check_branch
        %686 = sbr.rel (%p684) target = $region36
      $region35: #{npcc_loss.1} parent=27 // pred_region
        _
      $region36: #{npcc_loss.1} parent=27 // pred_fallthru
        _
    $region28: #{npcc_loss.1} parent=5 // pred_fallthru
      _
    %p687 = scmp.le.s32.totalorder 2, %s8
    // Predicated region
    $region37: #{npcc_loss.1} parent=5 // pred_check
      %p688 = pneg %p687
    $region38: #{npcc_loss.1} parent=5 // pred_check_branch
      %690 = sbr.rel (%p688) target = $region40
    $region39: #{npcc_loss.1} parent=5 // pred_region
      %s691 = ssub.s32 %s8, 2
      // Predicated region
      $region41: #{npcc_loss.1} parent=39 // pred_check
        %p692 = pneg %p109
      $region42: #{npcc_loss.1} parent=39 // pred_check_branch
        %694 = sbr.rel (%p692) target = $region44
      $region43: #{npcc_loss.1} parent=39 // pred_region
        %p695 = scmp.lt.s32.totalorder %s19, 1
        %s696 = scalar_select %p695, %s19, 1
        %s697 = smul.addr %s696, 8
        %s698 = scalar_lea.vmem %s2, %s697
      $region44: #{npcc_loss.1} parent=39 // pred_fallthru
        _
    $region40: #{npcc_loss.1} parent=5 // pred_fallthru
      _
  $region6: #{npcc_loss.1} parent=0 // loop_footer
    %s12 = sadd.s32 1, %s8
  $region7: #{npcc_loss.1} parent=0 // loop_footer_branch
    %7 = sbr.rel target = $region3
  $region8: #{npcc_loss.1} parent=0 // loop_exit
    _

</llo_original>
